<compile_context>
chip_gen: v6e
topology: v6e:2x2x1
jax: 0.10.0
libtpu: 0.0.40
codegen_flags: <defaults>
</compile_context>

<pallas_src>
import jax
import jax.numpy as jnp
from jax.experimental import pallas as pl
from jax.experimental.pallas import tpu as pltpu

B = 2                  # batch
C, Hs, Ws = 4, 4, 4    # example NCHW input -> flattened D = 64
D = C * Hs * Ws        # fc1 in_features (inferred)
HID = 32               # fc1 out_features / fc3 in_features
OUT = 2                # fc3 out_features


def classifier_kernel(x_ref, w_ref, o_ref):
    # x_ref: (B, D+2) augmented input, w_ref: (D+2, HID+1) packed parameters.
    # Gridless call: everything is a full-array VMEM block.
    x = x_ref[...]
    w = w_ref[...]

    # dropout(p=0.75): inference-mode identity.
    # TODO(synk): training-mode dropout (random mask + 1/(1-p) scaling) not implemented.

    # fc1 + bias + ReLU in a single MXU pass (bias rides the ones column of x_aug).
    # Lane HID of h is exactly 1 (the bd carrier for the fused head below).
    h = jnp.maximum(
        jnp.dot(x, w, preferred_element_type=jnp.float32), 0.0)        # (B, HID+1)

    # fc3 + softmax(dim=1) fused for the 2-class head:
    #   softmax([l0, l1]) == [sigmoid(l0 - l1), sigmoid(l1 - l0)]
    # Row 0 of w_pack holds [w3[:,1]-w3[:,0] | b3[1]-b3[0]]; since h[:, HID]==1,
    # the VPU dot below is  d = h @ dw + db  with no extra bias operand.
    wd = w[0:1, :]                                                      # (1, HID+1)
    d = jnp.sum(h * wd, axis=1, keepdims=True)                          # (B, 1)
    p1 = jax.nn.sigmoid(d)                                              # class-1 prob
    p0 = jax.nn.sigmoid(-d)                                             # class-0 prob (EUP, free)

    # Column order matches softmax(dim=1): [:, 0] = class 0, [:, 1] = class 1.
    o_ref[:, 0:1] = p0.astype(o_ref.dtype)
    o_ref[:, 1:2] = p1.astype(o_ref.dtype)


def _pack_operands(xb, w1, b1, w3, b3):
    """Fold all parameters into one weight block; augment x with [0 | x | 1]."""
    Bn, Dn = xb.shape
    hid = w1.shape[1]
    assert w3.shape == (hid, OUT)

    b1v = jnp.reshape(b1, (-1,)).astype(jnp.float32)          # (HID,), accepts (1,HID) too
    b3v = jnp.reshape(b3, (-1,)).astype(jnp.float32)          # (OUT,), accepts (1,OUT) too
    wd = (w3[:, 1] - w3[:, 0]).astype(jnp.float32)            # (HID,)
    bd = b3v[1] - b3v[0]                                       # scalar

    # x_aug = [0 | x | 1]: leading 0 zeroes the wd row in the fc1 matmul,
    # trailing 1 injects the fc1 bias row and keeps h's last lane == 1.
    x_aug = jnp.concatenate(
        [jnp.zeros((Bn, 1), jnp.float32),
         xb.astype(jnp.float32),
         jnp.ones((Bn, 1), jnp.float32)], axis=1)              # (B, D+2)

    w_left = jnp.concatenate(
        [wd[None, :], w1.astype(jnp.float32), b1v[None, :]], axis=0)    # (D+2, HID)
    last_col = jnp.concatenate(
        [bd[None], jnp.zeros((Dn,), jnp.float32),
         jnp.ones((1,), jnp.float32)], axis=0)[:, None]                  # (D+2, 1)
    w_pack = jnp.concatenate([w_left, last_col], axis=1)                 # (D+2, HID+1)
    return x_aug, w_pack


def classifier_forward(x_nchw, w1, b1, w3, b3):
    xb = x_nchw.reshape(x_nchw.shape[0], -1)                   # flatten (glue, plain JAX)
    x_aug, w_pack = _pack_operands(xb, w1, b1, w3, b3)          # wrapper-side, fused under jit

    vmem = pl.BlockSpec(memory_space=pltpu.MemorySpace.VMEM)
    return pl.pallas_call(
        classifier_kernel,
        out_shape=jax.ShapeDtypeStruct((xb.shape[0], OUT), jnp.float32),
        in_specs=[vmem, vmem],
        out_specs=vmem,
    )(x_aug, w_pack)
    # NOTE (scale-up path, not exercised at B=2): if a real batch exists upstream
    # (B in the hundreds+), tile B with BlockSpec((TB, D+2), lambda i: (i, 0)),
    # TB a multiple of 8 and >= 512, keep w_pack as a grid-invariant block
    # (lambda i: (0, 0)), mark the batch axis dimension_semantics=("parallel",)
    # (2x on v7x's two TensorCores, harmless on v5e/v6e), cast the matmul
    # operands to bf16 (f32 accumulation) to halve HBM read traffic, emit a
    # lane-dense p1-only slab instead of the 2-wide output to avoid masked
    # vst.msk stores, and re-derive TB / vmem_limit_bytes against v7x's 64 MiB
    # VMEM.  At B=2 all of that is pure overhead, so the call stays gridless.


def _reference(x_nchw, w1, b1, w3, b3):
    xb = x_nchw.reshape(x_nchw.shape[0], -1)
    h = jnp.maximum(xb @ w1 + jnp.reshape(b1, (-1,)), 0.0)
    logits = h @ w3 + jnp.reshape(b3, (-1,))
    return jax.nn.softmax(logits, axis=1)


if __name__ == "__main__":
    key = jax.random.PRNGKey(0)
    kx, k1, kb1, k3, kb3 = jax.random.split(key, 5)

    # Deterministic synthetic parameters (shapes from the module definition).
    x = jax.random.normal(kx, (B, C, Hs, Ws), dtype=jnp.float32)
    w1 = jax.random.normal(k1, (D, HID), dtype=jnp.float32) * 0.1    # fc1 weight (in, out)
    b1 = jax.random.normal(kb1, (HID,), dtype=jnp.float32) * 0.1     # fc1 bias (PyTorch-style 1-D)
    w3 = jax.random.normal(k3, (HID, OUT), dtype=jnp.float32) * 0.1  # fc3 weight (in, out)
    b3 = jax.random.normal(kb3, (OUT,), dtype=jnp.float32) * 0.1     # fc3 bias (PyTorch-style 1-D)

    fwd = jax.jit(classifier_forward)
    out = jax.block_until_ready(fwd(x, w1, b1, w3, b3))

    ref = _reference(x, w1, b1, w3, b3)
    assert out.shape == (B, OUT), out.shape
    assert jnp.allclose(out, ref, atol=1e-5, rtol=1e-5), (out, ref)
    assert jnp.allclose(jnp.sum(out, axis=1), 1.0, atol=1e-5)

    print("KERNEL_OK")
</pallas_src>

<mosaic_0001>
module attributes {stable_mosaic.version = 11 : i64} {
  func.func @classifier_kernel(%arg0: memref<2x66xf32, #tpu.memory_space<vmem>>, %arg1: memref<66x33xf32, #tpu.memory_space<vmem>>, %arg2: memref<2x2xf32, #tpu.memory_space<vmem>>) attributes {dimension_semantics = [], scalar_prefetch = 0 : i64, scratch_operands = 0 : i64, tpu.core_type = #tpu.core_type<tc>} {
    %c0 = arith.constant 0 : index
    %c0_0 = arith.constant 0 : index
    %0 = vector.load %arg0[%c0, %c0_0] : memref<2x66xf32, #tpu.memory_space<vmem>>, vector<2x66xf32>
    %c0_1 = arith.constant 0 : index
    %c0_2 = arith.constant 0 : index
    %1 = vector.load %arg1[%c0_1, %c0_2] : memref<66x33xf32, #tpu.memory_space<vmem>>, vector<66x33xf32>
    %cst = arith.constant dense<0.000000e+00> : vector<2x33xf32>
    %2 = tpu.matmul %0, %1, %cst {dimension_numbers = #tpu.dot_dimension_numbers<[1], [0], [0], [1], [0, 0, 1, 1], [], []>} : vector<2x66xf32>, vector<66x33xf32>, vector<2x33xf32> -> vector<2x33xf32>
    %cst_3 = arith.constant 0.000000e+00 : f32
    %3 = vector.broadcast %cst_3 : f32 to vector<2x33xf32>
    %4 = arith.maximumf %2, %3 : vector<2x33xf32>
    %5 = vector.extract_strided_slice %1 {offsets = [0, 0], sizes = [1, 33], strides = [1, 1]} : vector<66x33xf32> to vector<1x33xf32>
    %6 = vector.broadcast %5 : vector<1x33xf32> to vector<2x33xf32>
    %7 = arith.mulf %4, %6 : vector<2x33xf32>
    %cst_4 = arith.constant dense<0.000000e+00> : vector<2xf32>
    %8 = vector.multi_reduction <add>, %7, %cst_4 [1] : vector<2x33xf32> to vector<2xf32>
    %9 = vector.shape_cast %8 : vector<2xf32> to vector<2x1xf32>
    %10 = arith.negf %9 : vector<2x1xf32>
    %11 = math.exp %10 : vector<2x1xf32>
    %cst_5 = arith.constant 1.000000e+00 : f32
    %12 = vector.broadcast %cst_5 : f32 to vector<2x1xf32>
    %13 = arith.addf %12, %11 : vector<2x1xf32>
    %14 = arith.divf %12, %13 : vector<2x1xf32>
    %cst_6 = arith.constant 0.000000e+00 : f32
    %15 = vector.broadcast %cst_6 : f32 to vector<2x1xf32>
    %16 = arith.subf %15, %9 : vector<2x1xf32>
    %17 = arith.negf %16 : vector<2x1xf32>
    %18 = math.exp %17 : vector<2x1xf32>
    %cst_7 = arith.constant 1.000000e+00 : f32
    %19 = vector.broadcast %cst_7 : f32 to vector<2x1xf32>
    %20 = arith.addf %19, %18 : vector<2x1xf32>
    %21 = arith.divf %19, %20 : vector<2x1xf32>
    %c0_8 = arith.constant 0 : index
    %c0_9 = arith.constant 0 : index
    %22 = vector.load %arg2[%c0_8, %c0_9] : memref<2x2xf32, #tpu.memory_space<vmem>>, vector<2x1xf32>
    tpu.vector_store %arg2[%c0_8, %c0_9], %21 {strides = array<i32>} : memref<2x2xf32, #tpu.memory_space<vmem>>, vector<2x1xf32>,
    %c0_10 = arith.constant 0 : index
    %c1 = arith.constant 1 : index
    %23 = vector.load %arg2[%c0_10, %c1] : memref<2x2xf32, #tpu.memory_space<vmem>>, vector<2x1xf32>
    tpu.vector_store %arg2[%c0_10, %c1], %14 {strides = array<i32>} : memref<2x2xf32, #tpu.memory_space<vmem>>, vector<2x1xf32>,
    return
  }
}

</mosaic_0001>

<llo_original>
// kernel: classifier_forward.1
$region0: #{classifier_forward.1}
  #allocation0 [shape = 'u32[]', space=smem, size = 0x4, offset = 0x4, fixed_abs, tag = 'smem constant byte address 0x4 - core index']
  #allocation1 [shape = 'u32[144,128]{1,0:T(1,128)}', space=vmem, size = 0x12000, scoped, tag = 'internal scratch']
  %s0 = inlined_call_operand.vmem [shape: f32[2,66], index: 0, kind: input, shape index: {}]
  %s1 = inlined_call_operand.vmem [shape: f32[66,33], index: 1, kind: input, shape index: {}]
  %s2 = inlined_call_operand.hbm [shape: f32[2,2], index: 2, kind: output, shape index: {}]
  %s3 = sld [smem:[#allocation0]]
  $region18: #{classifier_forward.1} parent=0
    _
  %s5 = ssub.s32 1, %s3
  %s6 = scalar_select 0, %s5, %s3
  $region1: #{classifier_forward.1} parent=0
    #allocation2 [shape = 'u8[1024]{0}', space=vmem, size = 0x400, scoped, tag = 'output window, operand 0, single buffered']
    #allocation3 [shape = 's32[1]{0}', space=sflag, size = 0x4, scoped, tag = 'scoped memory for classifier_forward.1']
    %7 = vsyncpa [#allocation3], 0
    // Predicated region
    $region2: #{classifier_forward.1} parent=1 // pred_check
      _
    $region3: #{classifier_forward.1} parent=1 // pred_check_branch
      %9 = sbr.rel (0) target = $region5
    $region4: #{classifier_forward.1} parent=1 // pred_region
      _
    $region5: #{classifier_forward.1} parent=1 // pred_fallthru
      _
    // Predicated region
    $region6: #{classifier_forward.1} parent=1 // pred_check
      _
    $region7: #{classifier_forward.1} parent=1 // pred_check_branch
      %11 = sbr.rel (0) target = $region9
    $region8: #{classifier_forward.1} parent=1 // pred_region
      _
    $region9: #{classifier_forward.1} parent=1 // pred_fallthru
      _
    %v12 = vld [vmem:[%s0] sm:$0x3]
    %v13 = vld [vmem:[%s1] sm:$0xff]
    %v14 = vld [vmem:[%s1 + $0x8] sm:$0xff]
    %v15 = vld [vmem:[%s1 + $0x10] sm:$0xff]
    %v16 = vld [vmem:[%s1 + $0x18] sm:$0xff]
    %v17 = vld [vmem:[%s1 + $0x20] sm:$0xff]
    %v18 = vld [vmem:[%s1 + $0x28] sm:$0xff]
    %v19 = vld [vmem:[%s1 + $0x30] sm:$0xff]
    %v20 = vld [vmem:[%s1 + $0x38] sm:$0xff]
    %v21 = vld [vmem:[%s1 + $0x40] sm:$0x3]
    %vm22 = vcmask 539648
    %v24 = vsel %vm22, %v12, 0
    %vm26 = vcmask 1041408
    %v28 = vsel %vm26, %v21, 0
    %30 = vmatprep.subr.mxu0 0.0
    %31 = vmatpush1.msra.mxu0 0.0
    %32 = vmatprep.subr.mxu0 0.0
    %33 = vmatpush1.msra.mxu0 0.0
    %34 = vmatprep.subr.mxu0 0.0
    %35 = vmatpush1.msra.mxu0 0.0
    %36 = vmatprep.subr.mxu0 0.0
    %37 = vmatpush1.msra.mxu0 0.0
    %38 = vmatprep.subr.mxu0 0.0
    %39 = vmatpush1.msra.mxu0 0.0
    %40 = vmatprep.subr.mxu0 0.0
    %41 = vmatpush1.msra.mxu0 0.0
    %42 = vmatprep.subr.mxu0 0.0
    %43 = vmatpush1.msra.mxu0 0.0
    %44 = vmatprep.subr.mxu0 0.0
    %45 = vmatpush1.msra.mxu0 %v28
    %46 = vmatprep.subr.mxu0 0.0
    %47 = vmatpush1.msra.mxu0 %v20
    %48 = vmatprep.subr.mxu0 0.0
    %49 = vmatpush1.msra.mxu0 %v19
    %50 = vmatprep.subr.mxu0 0.0
    %51 = vmatpush1.msra.mxu0 %v18
    %52 = vmatprep.subr.mxu0 0.0
    %53 = vmatpush1.msra.mxu0 %v17
    %54 = vmatprep.subr.mxu0 0.0
    %55 = vmatpush1.msra.mxu0 %v16
    %56 = vmatprep.subr.mxu0 0.0
    %57 = vmatpush1.msra.mxu0 %v15
    %58 = vmatprep.subr.mxu0 0.0
    %59 = vmatpush1.msra.mxu0 %v14
    %60 = vmatprep.subr.mxu0 0.0
    %61 = vmatpush1.msra.mxu0 %v13
    %62 = vmatprep.subr.mxu0 0.0
    %63 = vmatpush2.msra.mxu0 0.0
    %64 = vmatprep.subr.mxu0 0.0
    %65 = vmatpush2.msra.mxu0 0.0
    %66 = vmatprep.subr.mxu0 0.0
    %67 = vmatpush2.msra.mxu0 0.0
    %68 = vmatprep.subr.mxu0 0.0
    %69 = vmatpush2.msra.mxu0 0.0
    %70 = vmatprep.subr.mxu0 0.0
    %71 = vmatpush2.msra.mxu0 0.0
    %72 = vmatprep.subr.mxu0 0.0
    %73 = vmatpush2.msra.mxu0 0.0
    %74 = vmatprep.subr.mxu0 0.0
    %75 = vmatpush2.msra.mxu0 0.0
    %76 = vmatprep.subr.mxu0 0.0
    %77 = vmatpush2.msra.mxu0 0.0
    %78 = vmatprep.subr.mxu0 0.0
    %79 = vmatpush2.msra.mxu0 0.0
    %80 = vmatprep.subr.mxu0 0.0
    %81 = vmatpush2.msra.mxu0 0.0
    %82 = vmatprep.subr.mxu0 0.0
    %83 = vmatpush2.msra.mxu0 0.0
    %84 = vmatprep.subr.mxu0 0.0
    %85 = vmatpush2.msra.mxu0 0.0
    %86 = vmatprep.subr.mxu0 0.0
    %87 = vmatpush2.msra.mxu0 0.0
    %88 = vmatprep.subr.mxu0 0.0
    %89 = vmatpush2.msra.mxu0 0.0
    %90 = vmatprep.subr.mxu0 0.0
    %91 = vmatpush2.msra.mxu0 0.0
    %92 = vmatprep.subr.mxu0 0.0
    %93 = vmatpush2.msra.mxu0 0.0
    %94 = vmatprep.mubr.f32.mxu0 0.0
    %95 = vmatmul.mubr.f32.gmra.mxu0 %v24
    %v96 = vpop.f32.mrf.mxu0
    %v97 = vadd.f32 0.0, %v96
    %v98 = vpop.f32.mrf.mxu0
    %99 = vdwg.mxu0
    %v100 = vmax.f32 %v97, 0.0
    %v101 = vlaneseq
    %v102 = vshrl.u32 %v101, 7
    %v103 = vsub.s32 0, %v102
    %v104 = vrot.slane %v13, %v103
    %v105 = vmul.f32 %v100, %v104
    %vm106 = vcmask 263168
    %v107 = vsel %vm106, %v105, 0.0
    %108 = vadd.xlane.f32.xlu0 %v107
    %v109 = vpop.xlane.xlu0 %108
    %v110 = vxor.u32 %v109, 2147483648
    %v111 = vmul.f32 %v110, 1.442695
    %v112 = vpow.pop %v111
    %v113 = vadd.f32 %v112, 1.0
    %v114 = vrcp.pop %v113
    %v115 = vmul.f32 1.0, %v114
    %v116 = vsub.f32 0.0, %v109
    %v117 = vxor.u32 %v116, 2147483648
    %v118 = vmul.f32 %v117, 1.442695
    %v119 = vpow.pop %v118
    %v120 = vadd.f32 %v119, 1.0
    %v121 = vrcp.pop %v120
    %v122 = vmul.f32 1.0, %v121
    %vm123 = vcmask 1024
    %124 = vst.msk [vmem:[#allocation2] sm:$0x3] %vm123, %v122
    %vm125 = vcmask 9224
    %126 = vst.msk [vmem:[#allocation2] sm:$0x3] %vm125, %v115
    // Predicated region
    $region10: #{classifier_forward.1} parent=1 // pred_check
      _
    $region11: #{classifier_forward.1} parent=1 // pred_check_branch
      %128 = sbr.rel (0) target = $region13
    $region12: #{classifier_forward.1} parent=1 // pred_region
      %s130 = ssub.s32 32, 32
      %131 = vsyncadd [#allocation3], %s130
      %s133 = sshll.u32 [#allocation2], 4
      %s134 = int_to_ptr.vmem [resolvable:$true] %s133
      %136 = dma.vmem_to_hbm [thread:$0]  %s134, 32, %s2, [#allocation3]
    $region13: #{classifier_forward.1} parent=1 // pred_fallthru
      _
    // Predicated region
    $region14: #{classifier_forward.1} parent=1 // pred_check
      _
    $region15: #{classifier_forward.1} parent=1 // pred_check_branch
      %138 = sbr.rel (0) target = $region17
    $region16: #{classifier_forward.1} parent=1 // pred_region
      %139 = dma.done [#allocation3], 32
    $region17: #{classifier_forward.1} parent=1 // pred_fallthru
      _
    %140 = vsyncpa [#allocation3], 1

</llo_original>
